<compile_context>
chip_gen: v7x
topology: tpu7x:2x2x1
jax: 0.10.0
libtpu: 0.0.40
codegen_flags: <defaults>
</compile_context>

<pallas_src>
import functools

import jax
import jax.numpy as jnp
from jax import lax
from jax.experimental import pallas as pl
from jax.experimental.pallas import tpu as pltpu


def _critic_kernel(x_ref, w1_ref, b1_ref, w2_ref, out_ref, *, n_items):
    # x_ref:  (TB * n_items, S)  rows = (batch, item) collapsed, S on lanes
    # w1_ref: (S, E)   b1_ref: (1, E)   w2_ref: (1, E)
    # out_ref: (1, TB) lane-dense row of per-batch outputs (b2 added by the wrapper)
    tb = out_ref.shape[-1]
    e = w1_ref.shape[-1]

    # Layer 1 (+ ReLU): a single 2-D MXU matmul over all TB*N rows, E lane-dense.
    h = jnp.dot(x_ref[...], w1_ref[...], preferred_element_type=jnp.float32)
    h = jnp.maximum(h + b1_ref[...], 0.0)                       # (TB*N, E)

    # Mean over the item axis BEFORE the second linear (they commute).
    # (TB*N, E) -> (TB, N, E) only regroups sublanes (free when N % 8 == 0).
    m = jnp.sum(h.reshape(tb, n_items, e), axis=1) * (1.0 / n_items)   # (TB, E)

    # Second linear as (1, E) . (TB, E)^T -> (1, TB): contracts the lane axis and
    # yields the result already lane-dense, so the writeback is one dense store.
    out_ref[...] = lax.dot_general(
        w2_ref[...], m, (((1,), (1,)), ((), ())),
        preferred_element_type=jnp.float32)


def knapsack_critic(state, w1, b1, w2, b2, *, block_b=None):
    """state: (B, N, 5) f32; w1: (5, E); b1: (E,); w2: (E, 1); b2: (1,) -> (B,) f32."""
    state = jnp.asarray(state, jnp.float32)
    B, N, S = state.shape
    E = w1.shape[-1]

    if block_b is None:
        block_b = B if B <= 128 else 128
    tb = int(block_b)
    b_pad = ((B + tb - 1) // tb) * tb
    if b_pad // tb > 1 and tb % 128 != 0:
        raise ValueError("block_b must be a multiple of 128 when the batch is tiled")
    if b_pad != B:
        # Padded batches produce garbage that is sliced away below (mean is per-batch,
        # so padding the batch axis never contaminates real outputs).
        state = jnp.pad(state, ((0, b_pad - B), (0, 0), (0, 0)))

    x2d = state.reshape(b_pad * N, S)                       # collapse (B, N) -> rows
    w1 = jnp.asarray(w1, jnp.float32)
    b1_row = jnp.asarray(b1, jnp.float32).reshape(1, E)
    w2_row = jnp.asarray(w2, jnp.float32).reshape(1, E)

    out = pl.pallas_call(
        functools.partial(_critic_kernel, n_items=N),
        out_shape=jax.ShapeDtypeStruct((1, b_pad), jnp.float32),
        grid=(b_pad // tb,),
        in_specs=[
            pl.BlockSpec((tb * N, S), lambda i: (i, 0)),    # batch tile of rows
            pl.BlockSpec((S, E), lambda i: (0, 0)),         # weights: fetched once
            pl.BlockSpec((1, E), lambda i: (0, 0)),
            pl.BlockSpec((1, E), lambda i: (0, 0)),
        ],
        out_specs=pl.BlockSpec((1, tb), lambda i: (0, i)),  # lane-dense output row
        compiler_params=pltpu.CompilerParams(
            dimension_semantics=("parallel",),              # shard batch across cores
        ),
    )(x2d, w1, b1_row, w2_row)

    b2_scalar = jnp.asarray(b2, jnp.float32).reshape(())
    return out[0, :B] + b2_scalar                           # fold the final bias here


# ----------------------------- reference & init ------------------------------

def _xavier_uniform(key, fan_in, fan_out, shape):
    bound = (6.0 / (fan_in + fan_out)) ** 0.5
    return jax.random.uniform(key, shape, jnp.float32, minval=-bound, maxval=bound)


def init_params(key, embed_dim, state_dim=5):
    # Xavier-uniform weights, biases filled with 0.01 (KnapsackCritic.init_weights).
    k1, k2 = jax.random.split(key)
    w1 = _xavier_uniform(k1, state_dim, embed_dim, (state_dim, embed_dim))
    b1 = jnp.full((embed_dim,), 0.01, jnp.float32)
    w2 = _xavier_uniform(k2, embed_dim, 1, (embed_dim, 1))
    b2 = jnp.full((1,), 0.01, jnp.float32)
    return w1, b1, w2, b2


def reference_forward(state, w1, b1, w2, b2):
    # Literal translation of the PyTorch ordering (2nd linear, then [..., 0].mean(-1)).
    h = jnp.maximum(state @ w1 + b1, 0.0)      # (B, N, E)
    y = h @ w2 + b2                            # (B, N, 1)
    return y[..., 0].mean(-1)                  # (B,)


if __name__ == "__main__":
    key = jax.random.PRNGKey(0)
    k_params, k_data = jax.random.split(key)
    S, E = 5, 32
    w1, b1, w2, b2 = init_params(k_params, embed_dim=E, state_dim=S)

    # (B, N): tiny single-block case, multi-block case, and a padded-batch case.
    for B, N in [(2, 8), (256, 8), (200, 8)]:
        k_data, k = jax.random.split(k_data)
        state = jax.random.normal(k, (B, N, S), jnp.float32)

        out = jax.block_until_ready(knapsack_critic(state, w1, b1, w2, b2))
        ref = reference_forward(state, w1, b1, w2, b2)

        assert out.shape == (B,), out.shape
        assert jnp.allclose(out, ref, atol=1e-5, rtol=1e-5), (
            B, N, float(jnp.max(jnp.abs(out - ref))))

    print("KERNEL_OK")
</pallas_src>

<mosaic_0001>
module attributes {stable_mosaic.version = 11 : i64} {
  func.func @_critic_kernel(%arg0: i32, %arg1: memref<16x5xf32, #tpu.memory_space<vmem>>, %arg2: memref<5x32xf32, #tpu.memory_space<vmem>>, %arg3: memref<1x32xf32, #tpu.memory_space<vmem>>, %arg4: memref<1x32xf32, #tpu.memory_space<vmem>>, %arg5: memref<1x2xf32, #tpu.memory_space<vmem>>) attributes {dimension_semantics = [#tpu.dimension_semantics<parallel>], iteration_bounds = array<i64: 1>, scalar_prefetch = 0 : i64, scratch_operands = 0 : i64, tpu.core_type = #tpu.core_type<tc>, window_params = [{transform_indices = @transform_0, window_bounds = array<i64: 16, 5>}, {pipeline_mode = #tpu.pipeline_mode<synchronous>, transform_indices = @transform_1, window_bounds = array<i64: 5, 32>}, {pipeline_mode = #tpu.pipeline_mode<synchronous>, transform_indices = @transform_2, window_bounds = array<i64: 1, 32>}, {pipeline_mode = #tpu.pipeline_mode<synchronous>, transform_indices = @transform_3, window_bounds = array<i64: 1, 32>}, {transform_indices = @transform_4, window_bounds = array<i64: 1, 2>}]} {
    %c0 = arith.constant 0 : index
    %c0_0 = arith.constant 0 : index
    %0 = vector.load %arg1[%c0, %c0_0] : memref<16x5xf32, #tpu.memory_space<vmem>>, vector<16x5xf32>
    %c0_1 = arith.constant 0 : index
    %c0_2 = arith.constant 0 : index
    %1 = vector.load %arg2[%c0_1, %c0_2] : memref<5x32xf32, #tpu.memory_space<vmem>>, vector<5x32xf32>
    %cst = arith.constant dense<0.000000e+00> : vector<16x32xf32>
    %2 = tpu.matmul %0, %1, %cst {dimension_numbers = #tpu.dot_dimension_numbers<[1], [0], [0], [1], [0, 0, 1, 1], [], []>} : vector<16x5xf32>, vector<5x32xf32>, vector<16x32xf32> -> vector<16x32xf32>
    %c0_3 = arith.constant 0 : index
    %c0_4 = arith.constant 0 : index
    %3 = vector.load %arg3[%c0_3, %c0_4] : memref<1x32xf32, #tpu.memory_space<vmem>>, vector<1x32xf32>
    %4 = vector.broadcast %3 : vector<1x32xf32> to vector<16x32xf32>
    %5 = arith.addf %2, %4 : vector<16x32xf32>
    %cst_5 = arith.constant 0.000000e+00 : f32
    %6 = vector.broadcast %cst_5 : f32 to vector<16x32xf32>
    %7 = arith.maximumf %5, %6 : vector<16x32xf32>
    %8 = vector.shape_cast %7 : vector<16x32xf32> to vector<2x8x32xf32>
    %cst_6 = arith.constant dense<0.000000e+00> : vector<2x32xf32>
    %9 = vector.multi_reduction <add>, %8, %cst_6 [1] : vector<2x8x32xf32> to vector<2x32xf32>
    %cst_7 = arith.constant 1.250000e-01 : f32
    %10 = vector.broadcast %cst_7 : f32 to vector<2x32xf32>
    %11 = arith.mulf %9, %10 : vector<2x32xf32>
    %c0_8 = arith.constant 0 : index
    %c0_9 = arith.constant 0 : index
    %12 = vector.load %arg4[%c0_8, %c0_9] : memref<1x32xf32, #tpu.memory_space<vmem>>, vector<1x32xf32>
    %cst_10 = arith.constant dense<0.000000e+00> : vector<1x2xf32>
    %13 = tpu.matmul %12, %11, %cst_10 {dimension_numbers = #tpu.dot_dimension_numbers<[1], [1], [0], [0], [0, 0, 1, 0], [], []>} : vector<1x32xf32>, vector<2x32xf32>, vector<1x2xf32> -> vector<1x2xf32>
    %c0_11 = arith.constant 0 : index
    %c0_12 = arith.constant 0 : index
    %14 = vector.load %arg5[%c0_11, %c0_12] : memref<1x2xf32, #tpu.memory_space<vmem>>, vector<1x2xf32>
    tpu.vector_store %arg5[%c0_11, %c0_12], %13 {strides = array<i32>} : memref<1x2xf32, #tpu.memory_space<vmem>>, vector<1x2xf32>,
    return
  }
  func.func @transform_0(%arg0: i32) -> (i32, i32) {
    %c0_i32 = arith.constant 0 : i32
    %c0_i32_0 = arith.constant 0 : i32
    return %arg0, %c0_i32 : i32, i32
  }
  func.func @transform_1(%arg0: i32) -> (i32, i32) {
    %c0_i32 = arith.constant 0 : i32
    %c0_i32_0 = arith.constant 0 : i32
    %c0_i32_1 = arith.constant 0 : i32
    return %c0_i32, %c0_i32_0 : i32, i32
  }
  func.func @transform_2(%arg0: i32) -> (i32, i32) {
    %c0_i32 = arith.constant 0 : i32
    %c0_i32_0 = arith.constant 0 : i32
    %c0_i32_1 = arith.constant 0 : i32
    return %c0_i32, %c0_i32_0 : i32, i32
  }
  func.func @transform_3(%arg0: i32) -> (i32, i32) {
    %c0_i32 = arith.constant 0 : i32
    %c0_i32_0 = arith.constant 0 : i32
    %c0_i32_1 = arith.constant 0 : i32
    return %c0_i32, %c0_i32_0 : i32, i32
  }
  func.func @transform_4(%arg0: i32) -> (i32, i32) {
    %c0_i32 = arith.constant 0 : i32
    %c0_i32_0 = arith.constant 0 : i32
    return %c0_i32, %arg0 : i32, i32
  }
}

</mosaic_0001>

<llo_original>
// kernel: tpu_custom_call.1
$region0: #{tpu_custom_call.1}
  #allocation0 [shape = 'u32[]', space=smem, size = 0x4, offset = 0x4, fixed_abs, tag = 'smem constant byte address 0x4 - core index']
  #allocation1 [shape = 'u32[144,128]{1,0:T(1,128)}', space=vmem, size = 0x12000, scoped, tag = 'internal scratch']
  %s0 = inlined_call_operand.vmem [shape: f32[16,5], index: 0, kind: input, shape index: {}]
  %s1 = inlined_call_operand.vmem [shape: f32[5,32], index: 1, kind: input, shape index: {}]
  %s2 = inlined_call_operand.vmem [shape: f32[1,32], index: 2, kind: input, shape index: {}]
  %s3 = inlined_call_operand.vmem [shape: f32[1,32], index: 3, kind: input, shape index: {}]
  %s4 = inlined_call_operand.hbm [shape: f32[1,2], index: 4, kind: output, shape index: {}]
  %s5 = sld [smem:[#allocation0]]
  $region26: #{tpu_custom_call.1} parent=0
    _
  %s7 = ssub.s32 1, %s5
  %s8 = scalar_select 0, %s7, %s5
  $region1: #{tpu_custom_call.1} parent=0
    #allocation2 [shape = 'u8[512]{0}', space=vmem, size = 0x400, scoped, tag = 'output window, operand 0, single buffered']
    #allocation3 [shape = 's32[1]{0}', space=sflag, size = 0x4, scoped, tag = 'scoped memory for tpu_custom_call.1']
    %9 = vsyncpa [#allocation3], 0
    // Predicated region
    $region2: #{tpu_custom_call.1} parent=1 // pred_check
      _
    $region3: #{tpu_custom_call.1} parent=1 // pred_check_branch
      %11 = sbr.rel (0) target = $region5
    $region4: #{tpu_custom_call.1} parent=1 // pred_region
      _
    $region5: #{tpu_custom_call.1} parent=1 // pred_fallthru
      _
    // Predicated region
    $region6: #{tpu_custom_call.1} parent=1 // pred_check
      _
    $region7: #{tpu_custom_call.1} parent=1 // pred_check_branch
      %13 = sbr.rel (0) target = $region9
    $region8: #{tpu_custom_call.1} parent=1 // pred_region
      _
    $region9: #{tpu_custom_call.1} parent=1 // pred_fallthru
      _
    // Predicated region
    $region10: #{tpu_custom_call.1} parent=1 // pred_check
      _
    $region11: #{tpu_custom_call.1} parent=1 // pred_check_branch
      %15 = sbr.rel (0) target = $region13
    $region12: #{tpu_custom_call.1} parent=1 // pred_region
      _
    $region13: #{tpu_custom_call.1} parent=1 // pred_fallthru
      _
    // Predicated region
    $region14: #{tpu_custom_call.1} parent=1 // pred_check
      _
    $region15: #{tpu_custom_call.1} parent=1 // pred_check_branch
      %17 = sbr.rel (0) target = $region17
    $region16: #{tpu_custom_call.1} parent=1 // pred_region
      _
    $region17: #{tpu_custom_call.1} parent=1 // pred_fallthru
      _
    %v18 = vld [vmem:[%s0] sm:$0xff]
    %v19 = vld [vmem:[%s0 + $0x8] sm:$0xff]
    %v20 = vld [vmem:[%s1] sm:$0x1f]
    %v21 = vld [vmem:[%s2] sm:$0x1]
    %v23 = vlaneseq
    %v24 = vshrl.u32 %v23, 7
    %v25 = vsub.s32 0, %v24
    %v26 = vrot.slane %v21, %v25
    %vm28 = vcmask 39936
    %v30 = vsel %vm28, %v18, 0
    %v33 = vsel %vm28, %v19, 0
    %vm35 = vcmask 1044480
    %v37 = vsel %vm35, %v20, 0
    %39 = vmatprep.subr.mxu0 0.0
    %40 = vmatpush1.msra.mxu0 %v37
    %41 = vmatprep.subr.mxu0 0.0
    %42 = vmatpush1.msra.mxu0 0.0
    %43 = vmatprep.subr.mxu0 0.0
    %44 = vmatpush1.msra.mxu0 0.0
    %45 = vmatprep.subr.mxu0 0.0
    %46 = vmatpush1.msra.mxu0 0.0
    %47 = vmatprep.subr.mxu0 0.0
    %48 = vmatpush1.msra.mxu0 0.0
    %49 = vmatprep.subr.mxu0 0.0
    %50 = vmatpush1.msra.mxu0 0.0
    %51 = vmatprep.subr.mxu0 0.0
    %52 = vmatpush1.msra.mxu0 0.0
    %53 = vmatprep.subr.mxu0 0.0
    %54 = vmatpush1.msra.mxu0 0.0
    %55 = vmatprep.subr.mxu0 0.0
    %56 = vmatpush1.msra.mxu0 0.0
    %57 = vmatprep.subr.mxu0 0.0
    %58 = vmatpush1.msra.mxu0 0.0
    %59 = vmatprep.subr.mxu0 0.0
    %60 = vmatpush1.msra.mxu0 0.0
    %61 = vmatprep.subr.mxu0 0.0
    %62 = vmatpush1.msra.mxu0 0.0
    %63 = vmatprep.subr.mxu0 0.0
    %64 = vmatpush1.msra.mxu0 0.0
    %65 = vmatprep.subr.mxu0 0.0
    %66 = vmatpush1.msra.mxu0 0.0
    %67 = vmatprep.subr.mxu0 0.0
    %68 = vmatpush1.msra.mxu0 0.0
    %69 = vmatprep.subr.mxu0 0.0
    %70 = vmatpush1.msra.mxu0 0.0
    %71 = vmatprep.subr.mxu0 0.0
    %72 = vmatpush1.msra.mxu0 0.0
    %73 = vmatprep.subr.mxu0 0.0
    %74 = vmatpush1.msra.mxu0 0.0
    %75 = vmatprep.subr.mxu0 0.0
    %76 = vmatpush1.msra.mxu0 0.0
    %77 = vmatprep.subr.mxu0 0.0
    %78 = vmatpush1.msra.mxu0 0.0
    %79 = vmatprep.subr.mxu0 0.0
    %80 = vmatpush1.msra.mxu0 0.0
    %81 = vmatprep.subr.mxu0 0.0
    %82 = vmatpush1.msra.mxu0 0.0
    %83 = vmatprep.subr.mxu0 0.0
    %84 = vmatpush1.msra.mxu0 0.0
    %85 = vmatprep.subr.mxu0 0.0
    %86 = vmatpush1.msra.mxu0 0.0
    %87 = vmatprep.subr.mxu0 0.0
    %88 = vmatpush1.msra.mxu0 0.0
    %89 = vmatprep.subr.mxu0 0.0
    %90 = vmatpush1.msra.mxu0 0.0
    %91 = vmatprep.subr.mxu0 0.0
    %92 = vmatpush1.msra.mxu0 0.0
    %93 = vmatprep.subr.mxu0 0.0
    %94 = vmatpush1.msra.mxu0 0.0
    %95 = vmatprep.subr.mxu0 0.0
    %96 = vmatpush1.msra.mxu0 0.0
    %97 = vmatprep.subr.mxu0 0.0
    %98 = vmatpush1.msra.mxu0 0.0
    %99 = vmatprep.subr.mxu0 0.0
    %100 = vmatpush1.msra.mxu0 0.0
    %101 = vmatprep.subr.mxu0 0.0
    %102 = vmatpush1.msra.mxu0 0.0
    %103 = vmatprep.mubr.f32.mxu0 0.0
    %104 = vmatmul.mubr.f32.gmra.mrb[0].mxu0 %v30
    %v105 = vpop.f32.mrb[0].mxu0
    %v106 = vadd.f32 %v26, %v105
    %v107 = vpop.f32.mrb[0].mxu0
    %108 = vmatprep.mubr.f32.mxu0 0.0
    %109 = vmatmul.mubr.f32.gmra.mrb[0].mxu0 %v33
    %v110 = vpop.f32.mrb[0].mxu0
    %v111 = vadd.f32 %v26, %v110
    %v112 = vpop.f32.mrb[0].mxu0
    %113 = vdwg.mxu0
    %v114 = vmax.f32 %v106, 0.0
    %v115 = vmax.f32 %v111, 0.0
    %vm116 = vcmask 261120
    %v117 = vsel %vm116, %v114, 0.0
    %v118 = vrot.slane %v117, 4
    %v119 = vadd.f32 %v117, %v118
    %v120 = vrot.slane %v119, 2
    %v121 = vadd.f32 %v119, %v120
    %v122 = vrot.slane %v121, 1
    %v123 = vadd.f32 %v121, %v122
    %v124 = vsel %vm116, %v115, 0.0
    %v125 = vrot.slane %v124, 4
    %v126 = vadd.f32 %v124, %v125
    %v127 = vrot.slane %v126, 2
    %v128 = vadd.f32 %v126, %v127
    %v129 = vrot.slane %v128, 1
    %v130 = vadd.f32 %v128, %v129
    %v131 = vmul.f32 %v123, 0.125
    %v132 = vmul.f32 %v130, 0.125
    %v133 = vld [vmem:[%s3] sm:$0x1]
    %vm136 = vcmask 1041409
    %v137 = vsel %vm136, %v132, %v131
    %v139 = vsel %vm116, %v133, 0
    %v141 = vsel %vm116, %v137, 0
    %143 = vmatprep.subr.mxu0 0.0
    %144 = vmatpush1.xpose.msra.mxu0 %v141
    %145 = vmatprep.subr.mxu0 0.0
    %146 = vmatpush1.xpose.msra.mxu0 0.0
    %147 = vmatprep.subr.mxu0 0.0
    %148 = vmatpush1.xpose.msra.mxu0 0.0
    %149 = vmatprep.subr.mxu0 0.0
    %150 = vmatpush1.xpose.msra.mxu0 0.0
    %151 = vmatprep.subr.mxu0 0.0
    %152 = vmatpush1.xpose.msra.mxu0 0.0
    %153 = vmatprep.subr.mxu0 0.0
    %154 = vmatpush1.xpose.msra.mxu0 0.0
    %155 = vmatprep.subr.mxu0 0.0
    %156 = vmatpush1.xpose.msra.mxu0 0.0
    %157 = vmatprep.subr.mxu0 0.0
    %158 = vmatpush1.xpose.msra.mxu0 0.0
    %159 = vmatprep.subr.mxu0 0.0
    %160 = vmatpush1.xpose.msra.mxu0 0.0
    %161 = vmatprep.subr.mxu0 0.0
    %162 = vmatpush1.xpose.msra.mxu0 0.0
    %163 = vmatprep.subr.mxu0 0.0
    %164 = vmatpush1.xpose.msra.mxu0 0.0
    %165 = vmatprep.subr.mxu0 0.0
    %166 = vmatpush1.xpose.msra.mxu0 0.0
    %167 = vmatprep.subr.mxu0 0.0
    %168 = vmatpush1.xpose.msra.mxu0 0.0
    %169 = vmatprep.subr.mxu0 0.0
    %170 = vmatpush1.xpose.msra.mxu0 0.0
    %171 = vmatprep.subr.mxu0 0.0
    %172 = vmatpush1.xpose.msra.mxu0 0.0
    %173 = vmatprep.subr.mxu0 0.0
    %174 = vmatpush1.xpose.msra.mxu0 0.0
    %175 = vmatprep.subr.mxu0 0.0
    %176 = vmatpush1.xpose.msra.mxu0 0.0
    %177 = vmatprep.subr.mxu0 0.0
    %178 = vmatpush1.xpose.msra.mxu0 0.0
    %179 = vmatprep.subr.mxu0 0.0
    %180 = vmatpush1.xpose.msra.mxu0 0.0
    %181 = vmatprep.subr.mxu0 0.0
    %182 = vmatpush1.xpose.msra.mxu0 0.0
    %183 = vmatprep.subr.mxu0 0.0
    %184 = vmatpush1.xpose.msra.mxu0 0.0
    %185 = vmatprep.subr.mxu0 0.0
    %186 = vmatpush1.xpose.msra.mxu0 0.0
    %187 = vmatprep.subr.mxu0 0.0
    %188 = vmatpush1.xpose.msra.mxu0 0.0
    %189 = vmatprep.subr.mxu0 0.0
    %190 = vmatpush1.xpose.msra.mxu0 0.0
    %191 = vmatprep.subr.mxu0 0.0
    %192 = vmatpush1.xpose.msra.mxu0 0.0
    %193 = vmatprep.subr.mxu0 0.0
    %194 = vmatpush1.xpose.msra.mxu0 0.0
    %195 = vmatprep.subr.mxu0 0.0
    %196 = vmatpush1.xpose.msra.mxu0 0.0
    %197 = vmatprep.subr.mxu0 0.0
    %198 = vmatpush1.xpose.msra.mxu0 0.0
    %199 = vmatprep.subr.mxu0 0.0
    %200 = vmatpush1.xpose.msra.mxu0 0.0
    %201 = vmatprep.subr.mxu0 0.0
    %202 = vmatpush1.xpose.msra.mxu0 0.0
    %203 = vmatprep.subr.mxu0 0.0
    %204 = vmatpush1.xpose.msra.mxu0 0.0
    %205 = vmatprep.subr.mxu0 0.0
    %206 = vmatpush1.xpose.msra.mxu0 0.0
    %207 = vmatprep.mubr.f32.mxu0 0.0
    %208 = vmatmul.mubr.f32.gmra.mrb[0].mxu0 %v139
    %v209 = vpop.f32.mrb[0].mxu0
    %v210 = vadd.f32 0.0, %v209
    %v211 = vpop.f32.mrb[0].mxu0
    %212 = vdwg.mxu0
    %vm213 = vcmask 8192
    %214 = vst.msk [vmem:[#allocation2] sm:$0x1] %vm213, %v210
    // Predicated region
    $region18: #{tpu_custom_call.1} parent=1 // pred_check
      _
    $region19: #{tpu_custom_call.1} parent=1 // pred_check_branch
      %216 = sbr.rel (0) target = $region21
    $region20: #{tpu_custom_call.1} parent=1 // pred_region
      %s218 = ssub.s32 16, 16
      %219 = vsyncadd [#allocation3], %s218
      %s221 = sshll.u32 [#allocation2], 4
      %s222 = int_to_ptr.vmem [resolvable:$true] %s221
      %224 = dma.vmem_to_hbm [thread:$0]  %s222, 16, %s4, [#allocation3]
    $region21: #{tpu_custom_call.1} parent=1 // pred_fallthru
      _
    // Predicated region
    $region22: #{tpu_custom_call.1} parent=1 // pred_check
      _
    $region23: #{tpu_custom_call.1} parent=1 // pred_check_branch
      %226 = sbr.rel (0) target = $region25
    $region24: #{tpu_custom_call.1} parent=1 // pred_region
      %227 = dma.done [#allocation3], 16
    $region25: #{tpu_custom_call.1} parent=1 // pred_fallthru
      _
    %228 = vsyncpa [#allocation3], 1

</llo_original>
